<compile_context>
chip_gen: v7x
topology: tpu7x:2x2x1
jax: 0.10.0
libtpu: 0.0.40
codegen_flags: <defaults>
</compile_context>

<pallas_src>
import functools

import jax
import jax.numpy as jnp
from jax.experimental import pallas as pl
from jax.experimental.pallas import tpu as pltpu


def _cp_residual_kernel(x_ref, w_ref, b_ref, g1_ref, be1_ref, g2_ref, be2_ref,
                        out_ref, *, dilation, kernel_size, eps):
    # x_ref / out_ref : (Bt, L, C) blocks in the module's native (B, L, C) layout.
    # w_ref           : (K*C, C) pre-stacked conv weight, row j*C+i holds W[o=:, i, j].
    # b_ref           : (1, C) conv bias.
    # g*/be*          : (L, C) LayerNorm affine params (transposed from torch's (C, L)).
    K = kernel_size
    Bt, L, C = x_ref.shape

    w = w_ref[...]            # (K*C, C)   grid-constant, DMA'd once
    bias = b_ref[...]         # (1, C)
    g1 = g1_ref[...]
    b1 = be1_ref[...]
    g2 = g2_ref[...]
    b2 = be2_ref[...]

    inv_n = 1.0 / float(L * C)

    pad1 = (K - 1) * dilation
    pad2 = (K - 1) * 2 * dilation
    zpad1 = jnp.zeros((pad1, C), jnp.float32) if pad1 > 0 else None
    zpad2 = jnp.zeros((pad2, C), jnp.float32) if pad2 > 0 else None

    def causal_conv(inp, dil, zpad):
        # y[t, o] = bias[o] + sum_{j,i} W[o,i,j] * x[t-(K-1-j)*dil, i]
        # Build all K causal taps as one (L, K*C) slab -> single MXU matmul.
        xpad = inp if zpad is None else jnp.concatenate([zpad, inp], axis=0)
        taps = [xpad[j * dil: j * dil + L, :] for j in range(K)]
        stacked = taps[0] if K == 1 else jnp.concatenate(taps, axis=-1)  # (L, K*C)
        return jnp.dot(stacked, w, preferred_element_type=jnp.float32) + bias

    def ln_relu(y, gamma, beta):
        # One-pass stats over the whole (L, C) tile: var = E[y^2] - mean^2.
        mean = jnp.sum(y) * inv_n
        ex2 = jnp.sum(y * y) * inv_n
        var = ex2 - mean * mean
        yn = (y - mean) * jax.lax.rsqrt(var + eps)
        return jnp.maximum(yn * gamma + beta, 0.0)

    for bi in range(Bt):                       # static unroll over the batch block
        xb = x_ref[bi].astype(jnp.float32)     # (L, C)
        y = ln_relu(causal_conv(xb, dilation, zpad1), g1, b1)
        y = ln_relu(causal_conv(y, 2 * dilation, zpad2), g2, b2)
        out_ref[bi] = (xb + y).astype(out_ref.dtype)


def _pick_batch_tile(B, L, C, *, vmem_budget_bytes=8 << 20, cap=32):
    """Largest divisor of B that fits the VMEM budget and leaves a grid of >= 2."""
    # Per batch element in the pipeline: x + out, each double-buffered, f32.
    per_b = 2 * 2 * L * C * 4
    max_bt = max(1, min(cap, vmem_budget_bytes // max(per_b, 1)))
    target_grid = 2 if B >= 2 else 1
    best = 1
    for bt in range(1, min(B, max_bt) + 1):
        if B % bt == 0 and B // bt >= target_grid:
            best = bt
    return best


def cp_residual_block_adjacent(x_blc, w4, bias, g1, be1, g2, be2,
                               *, dilation, kernel_size, eps=1e-5,
                               batch_tile=None):
    """x_blc: (B, L, C) like the PyTorch module; returns (B, L, C)."""
    B, L, C = x_blc.shape
    K = kernel_size
    Bt = batch_tile if batch_tile is not None else _pick_batch_tile(B, L, C)
    assert B % Bt == 0, "batch tile must divide the batch size"

    # Parameter-only preprocessing (tiny, one-off) -- no activation transposes.
    w_oik = w4.reshape(C, C, K).astype(jnp.float32)                 # (O, I, K)
    w_stack = jnp.transpose(w_oik, (2, 1, 0)).reshape(K * C, C)     # row j*C+i -> col o
    b_row = bias.reshape(1, C).astype(jnp.float32)
    g1_lc = jnp.transpose(g1.astype(jnp.float32))                   # (L, C)
    be1_lc = jnp.transpose(be1.astype(jnp.float32))
    g2_lc = jnp.transpose(g2.astype(jnp.float32))
    be2_lc = jnp.transpose(be2.astype(jnp.float32))

    kernel = functools.partial(_cp_residual_kernel,
                               dilation=dilation, kernel_size=K, eps=eps)

    # Explicit VMEM budget (x + out double-buffered plus grid-constant params);
    # only override the default scoped limit when the blocks actually need it
    # (important for production sizes on v7x's 64 MiB VMEM).
    need_bytes = 4 * (2 * 2 * Bt * L * C + K * C * C + C + 4 * L * C) + (2 << 20)
    cp_kwargs = dict(dimension_semantics=("parallel",))
    if need_bytes > (16 << 20):
        cp_kwargs["vmem_limit_bytes"] = min(need_bytes, 48 << 20)

    out = pl.pallas_call(
        kernel,
        out_shape=jax.ShapeDtypeStruct((B, L, C), x_blc.dtype),
        grid_spec=pltpu.PrefetchScalarGridSpec(
            num_scalar_prefetch=0,
            grid=(B // Bt,),
            in_specs=[
                pl.BlockSpec((Bt, L, C), lambda b: (b, 0, 0)),   # x (native layout)
                pl.BlockSpec((K * C, C), lambda b: (0, 0)),      # stacked conv weight
                pl.BlockSpec((1, C), lambda b: (0, 0)),          # conv bias
                pl.BlockSpec((L, C), lambda b: (0, 0)),          # ln1 gamma
                pl.BlockSpec((L, C), lambda b: (0, 0)),          # ln1 beta
                pl.BlockSpec((L, C), lambda b: (0, 0)),          # ln2 gamma
                pl.BlockSpec((L, C), lambda b: (0, 0)),          # ln2 beta
            ],
            out_specs=pl.BlockSpec((Bt, L, C), lambda b: (b, 0, 0)),
        ),
        compiler_params=pltpu.CompilerParams(**cp_kwargs),
    )(x_blc, w_stack, b_row, g1_lc, be1_lc, g2_lc, be2_lc)

    return out


def _reference_forward(x_blc, w4, bias, g1, be1, g2, be2,
                       *, dilation, kernel_size, eps=1e-5):
    """Plain-JAX reference reproducing the PyTorch forward exactly."""
    B, L, C = x_blc.shape
    K = kernel_size
    x = jnp.transpose(x_blc, (0, 2, 1))                 # (B, C, L)
    w = w4.reshape(C, C, K)                             # OIH

    def conv(inp, dil):
        pad = (K - 1) * dil                             # causal left pad
        y = jax.lax.conv_general_dilated(
            inp, w, window_strides=(1,), padding=[(pad, 0)],
            rhs_dilation=(dil,), dimension_numbers=("NCH", "OIH", "NCH"))
        return y + bias[None, :, None]

    def ln(y, gamma, beta):
        mean = jnp.mean(y, axis=(1, 2), keepdims=True)
        var = jnp.mean((y - mean) ** 2, axis=(1, 2), keepdims=True)
        return (y - mean) / jnp.sqrt(var + eps) * gamma[None] + beta[None]

    y = jax.nn.relu(ln(conv(x, dilation), g1, be1))
    y = jax.nn.relu(ln(conv(y, 2 * dilation), g2, be2))
    return x_blc + jnp.transpose(y, (0, 2, 1))


if __name__ == "__main__":
    # Module hyper-params: in_channels == out_channels == C, input length is seqlen-1.
    B, C, K, seqlen, dilation = 4, 4, 3, 16, 1
    L = seqlen - 1

    key = jax.random.PRNGKey(0)
    kw, kb, kg1, kb1, kg2, kb2, kx = jax.random.split(key, 7)

    # Deterministic synthetic parameters (shapes from nn.Conv2d / nn.LayerNorm).
    w4 = 0.3 * jax.random.normal(kw, (C, C, 1, K), jnp.float32)   # (Cout, Cin, 1, K)
    bias = 0.1 * jax.random.normal(kb, (C,), jnp.float32)
    g1 = 1.0 + 0.1 * jax.random.normal(kg1, (C, L), jnp.float32)
    be1 = 0.1 * jax.random.normal(kb1, (C, L), jnp.float32)
    g2 = 1.0 + 0.1 * jax.random.normal(kg2, (C, L), jnp.float32)
    be2 = 0.1 * jax.random.normal(kb2, (C, L), jnp.float32)

    x = jax.random.normal(kx, (B, L, C), jnp.float32)             # (B, seqlen-1, C)

    out = cp_residual_block_adjacent(x, w4, bias, g1, be1, g2, be2,
                                     dilation=dilation, kernel_size=K)
    out = jax.block_until_ready(out)

    ref = _reference_forward(x, w4, bias, g1, be1, g2, be2,
                             dilation=dilation, kernel_size=K)
    assert out.shape == x.shape
    assert jnp.allclose(out, ref, atol=1e-4, rtol=1e-4), "mismatch vs reference"

    print("KERNEL_OK")
</pallas_src>

<mosaic_0001>
module attributes {stable_mosaic.version = 11 : i64} {
  func.func @_cp_residual_kernel(%arg0: i32, %arg1: memref<2x15x4xf32, #tpu.memory_space<vmem>>, %arg2: memref<12x4xf32, #tpu.memory_space<vmem>>, %arg3: memref<1x4xf32, #tpu.memory_space<vmem>>, %arg4: memref<15x4xf32, #tpu.memory_space<vmem>>, %arg5: memref<15x4xf32, #tpu.memory_space<vmem>>, %arg6: memref<15x4xf32, #tpu.memory_space<vmem>>, %arg7: memref<15x4xf32, #tpu.memory_space<vmem>>, %arg8: memref<2x15x4xf32, #tpu.memory_space<vmem>>) attributes {dimension_semantics = [#tpu.dimension_semantics<parallel>], iteration_bounds = array<i64: 2>, scalar_prefetch = 0 : i64, scratch_operands = 0 : i64, tpu.core_type = #tpu.core_type<tc>, window_params = [{transform_indices = @transform_0, window_bounds = array<i64: 2, 15, 4>}, {pipeline_mode = #tpu.pipeline_mode<synchronous>, transform_indices = @transform_1, window_bounds = array<i64: 12, 4>}, {pipeline_mode = #tpu.pipeline_mode<synchronous>, transform_indices = @transform_2, window_bounds = array<i64: 1, 4>}, {pipeline_mode = #tpu.pipeline_mode<synchronous>, transform_indices = @transform_3, window_bounds = array<i64: 15, 4>}, {pipeline_mode = #tpu.pipeline_mode<synchronous>, transform_indices = @transform_4, window_bounds = array<i64: 15, 4>}, {pipeline_mode = #tpu.pipeline_mode<synchronous>, transform_indices = @transform_5, window_bounds = array<i64: 15, 4>}, {pipeline_mode = #tpu.pipeline_mode<synchronous>, transform_indices = @transform_6, window_bounds = array<i64: 15, 4>}, {transform_indices = @transform_7, window_bounds = array<i64: 2, 15, 4>}]} {
    %c0 = arith.constant 0 : index
    %c0_0 = arith.constant 0 : index
    %0 = vector.load %arg2[%c0, %c0_0] : memref<12x4xf32, #tpu.memory_space<vmem>>, vector<12x4xf32>
    %c0_1 = arith.constant 0 : index
    %c0_2 = arith.constant 0 : index
    %1 = vector.load %arg3[%c0_1, %c0_2] : memref<1x4xf32, #tpu.memory_space<vmem>>, vector<1x4xf32>
    %c0_3 = arith.constant 0 : index
    %c0_4 = arith.constant 0 : index
    %2 = vector.load %arg4[%c0_3, %c0_4] : memref<15x4xf32, #tpu.memory_space<vmem>>, vector<15x4xf32>
    %c0_5 = arith.constant 0 : index
    %c0_6 = arith.constant 0 : index
    %3 = vector.load %arg5[%c0_5, %c0_6] : memref<15x4xf32, #tpu.memory_space<vmem>>, vector<15x4xf32>
    %c0_7 = arith.constant 0 : index
    %c0_8 = arith.constant 0 : index
    %4 = vector.load %arg6[%c0_7, %c0_8] : memref<15x4xf32, #tpu.memory_space<vmem>>, vector<15x4xf32>
    %c0_9 = arith.constant 0 : index
    %c0_10 = arith.constant 0 : index
    %5 = vector.load %arg7[%c0_9, %c0_10] : memref<15x4xf32, #tpu.memory_space<vmem>>, vector<15x4xf32>
    %cst = arith.constant 0.000000e+00 : f32
    %6 = vector.broadcast %cst : f32 to vector<2x4xf32>
    %cst_11 = arith.constant 0.000000e+00 : f32
    %7 = vector.broadcast %cst_11 : f32 to vector<4x4xf32>
    %c0_12 = arith.constant 0 : index
    %c0_13 = arith.constant 0 : index
    %c0_14 = arith.constant 0 : index
    %8 = vector.load %arg1[%c0_12, %c0_13, %c0_14] : memref<2x15x4xf32, #tpu.memory_space<vmem>>, vector<1x15x4xf32>
    %9 = vector.shape_cast %8 : vector<1x15x4xf32> to vector<15x4xf32>
    %10 = tpu.concatenate %6, %9 in 0 : vector<2x4xf32>, vector<15x4xf32> -> vector<17x4xf32>
    %11 = vector.extract_strided_slice %10 {offsets = [0, 0], sizes = [15, 4], strides = [1, 1]} : vector<17x4xf32> to vector<15x4xf32>
    %12 = vector.extract_strided_slice %10 {offsets = [1, 0], sizes = [15, 4], strides = [1, 1]} : vector<17x4xf32> to vector<15x4xf32>
    %13 = vector.extract_strided_slice %10 {offsets = [2, 0], sizes = [15, 4], strides = [1, 1]} : vector<17x4xf32> to vector<15x4xf32>
    %14 = tpu.concatenate %11, %12, %13 in 1 : vector<15x4xf32>, vector<15x4xf32>, vector<15x4xf32> -> vector<15x12xf32>
    %cst_15 = arith.constant dense<0.000000e+00> : vector<15x4xf32>
    %15 = tpu.matmul %14, %0, %cst_15 {dimension_numbers = #tpu.dot_dimension_numbers<[1], [0], [0], [1], [0, 0, 1, 1], [], []>} : vector<15x12xf32>, vector<12x4xf32>, vector<15x4xf32> -> vector<15x4xf32>
    %16 = vector.broadcast %1 : vector<1x4xf32> to vector<15x4xf32>
    %17 = arith.addf %15, %16 : vector<15x4xf32>
    %18 = vector.shape_cast %17 : vector<15x4xf32> to vector<1x15x4xf32>
    %cst_16 = arith.constant dense<0.000000e+00> : vector<1xf32>
    %19 = vector.multi_reduction <add>, %18, %cst_16 [1, 2] : vector<1x15x4xf32> to vector<1xf32>
    %20 = vector.shape_cast %19 : vector<1xf32> to vector<1x1x1xf32>
    %21 = vector.extract %20[0, 0, 0] : f32 from vector<1x1x1xf32>
    %cst_17 = arith.constant 0.0166666675 : f32
    %22 = arith.mulf %21, %cst_17 : f32
    %23 = arith.mulf %17, %17 : vector<15x4xf32>
    %24 = vector.shape_cast %23 : vector<15x4xf32> to vector<1x15x4xf32>
    %cst_18 = arith.constant dense<0.000000e+00> : vector<1xf32>
    %25 = vector.multi_reduction <add>, %24, %cst_18 [1, 2] : vector<1x15x4xf32> to vector<1xf32>
    %26 = vector.shape_cast %25 : vector<1xf32> to vector<1x1x1xf32>
    %27 = vector.extract %26[0, 0, 0] : f32 from vector<1x1x1xf32>
    %cst_19 = arith.constant 0.0166666675 : f32
    %28 = arith.mulf %27, %cst_19 : f32
    %29 = arith.mulf %22, %22 : f32
    %30 = arith.subf %28, %29 : f32
    %31 = vector.broadcast %22 : f32 to vector<15x4xf32>
    %32 = arith.subf %17, %31 : vector<15x4xf32>
    %cst_20 = arith.constant 9.99999974E-6 : f32
    %33 = arith.addf %30, %cst_20 : f32
    %34 = math.rsqrt %33 : f32
    %35 = vector.broadcast %34 : f32 to vector<15x4xf32>
    %36 = arith.mulf %32, %35 : vector<15x4xf32>
    %37 = arith.mulf %36, %2 : vector<15x4xf32>
    %38 = arith.addf %37, %3 : vector<15x4xf32>
    %cst_21 = arith.constant 0.000000e+00 : f32
    %39 = vector.broadcast %cst_21 : f32 to vector<15x4xf32>
    %40 = arith.maximumf %38, %39 : vector<15x4xf32>
    %41 = tpu.concatenate %7, %40 in 0 : vector<4x4xf32>, vector<15x4xf32> -> vector<19x4xf32>
    %42 = vector.extract_strided_slice %41 {offsets = [0, 0], sizes = [15, 4], strides = [1, 1]} : vector<19x4xf32> to vector<15x4xf32>
    %43 = vector.extract_strided_slice %41 {offsets = [2, 0], sizes = [15, 4], strides = [1, 1]} : vector<19x4xf32> to vector<15x4xf32>
    %44 = vector.extract_strided_slice %41 {offsets = [4, 0], sizes = [15, 4], strides = [1, 1]} : vector<19x4xf32> to vector<15x4xf32>
    %45 = tpu.concatenate %42, %43, %44 in 1 : vector<15x4xf32>, vector<15x4xf32>, vector<15x4xf32> -> vector<15x12xf32>
    %cst_22 = arith.constant dense<0.000000e+00> : vector<15x4xf32>
    %46 = tpu.matmul %45, %0, %cst_22 {dimension_numbers = #tpu.dot_dimension_numbers<[1], [0], [0], [1], [0, 0, 1, 1], [], []>} : vector<15x12xf32>, vector<12x4xf32>, vector<15x4xf32> -> vector<15x4xf32>
    %47 = vector.broadcast %1 : vector<1x4xf32> to vector<15x4xf32>
    %48 = arith.addf %46, %47 : vector<15x4xf32>
    %49 = vector.shape_cast %48 : vector<15x4xf32> to vector<1x15x4xf32>
    %cst_23 = arith.constant dense<0.000000e+00> : vector<1xf32>
    %50 = vector.multi_reduction <add>, %49, %cst_23 [1, 2] : vector<1x15x4xf32> to vector<1xf32>
    %51 = vector.shape_cast %50 : vector<1xf32> to vector<1x1x1xf32>
    %52 = vector.extract %51[0, 0, 0] : f32 from vector<1x1x1xf32>
    %cst_24 = arith.constant 0.0166666675 : f32
    %53 = arith.mulf %52, %cst_24 : f32
    %54 = arith.mulf %48, %48 : vector<15x4xf32>
    %55 = vector.shape_cast %54 : vector<15x4xf32> to vector<1x15x4xf32>
    %cst_25 = arith.constant dense<0.000000e+00> : vector<1xf32>
    %56 = vector.multi_reduction <add>, %55, %cst_25 [1, 2] : vector<1x15x4xf32> to vector<1xf32>
    %57 = vector.shape_cast %56 : vector<1xf32> to vector<1x1x1xf32>
    %58 = vector.extract %57[0, 0, 0] : f32 from vector<1x1x1xf32>
    %cst_26 = arith.constant 0.0166666675 : f32
    %59 = arith.mulf %58, %cst_26 : f32
    %60 = arith.mulf %53, %53 : f32
    %61 = arith.subf %59, %60 : f32
    %62 = vector.broadcast %53 : f32 to vector<15x4xf32>
    %63 = arith.subf %48, %62 : vector<15x4xf32>
    %cst_27 = arith.constant 9.99999974E-6 : f32
    %64 = arith.addf %61, %cst_27 : f32
    %65 = math.rsqrt %64 : f32
    %66 = vector.broadcast %65 : f32 to vector<15x4xf32>
    %67 = arith.mulf %63, %66 : vector<15x4xf32>
    %68 = arith.mulf %67, %4 : vector<15x4xf32>
    %69 = arith.addf %68, %5 : vector<15x4xf32>
    %cst_28 = arith.constant 0.000000e+00 : f32
    %70 = vector.broadcast %cst_28 : f32 to vector<15x4xf32>
    %71 = arith.maximumf %69, %70 : vector<15x4xf32>
    %72 = arith.addf %9, %71 : vector<15x4xf32>
    %c0_29 = arith.constant 0 : index
    %c0_30 = arith.constant 0 : index
    %c0_31 = arith.constant 0 : index
    %73 = vector.load %arg8[%c0_29, %c0_30, %c0_31] : memref<2x15x4xf32, #tpu.memory_space<vmem>>, vector<1x15x4xf32>
    %74 = vector.shape_cast %73 : vector<1x15x4xf32> to vector<15x4xf32>
    %75 = vector.shape_cast %72 : vector<15x4xf32> to vector<1x15x4xf32>
    tpu.vector_store %arg8[%c0_29, %c0_30, %c0_31], %75 {strides = array<i32>} : memref<2x15x4xf32, #tpu.memory_space<vmem>>, vector<1x15x4xf32>,
    %c1 = arith.constant 1 : index
    %c0_32 = arith.constant 0 : index
    %c0_33 = arith.constant 0 : index
    %76 = vector.load %arg1[%c1, %c0_32, %c0_33] : memref<2x15x4xf32, #tpu.memory_space<vmem>>, vector<1x15x4xf32>
    %77 = vector.shape_cast %76 : vector<1x15x4xf32> to vector<15x4xf32>
    %78 = tpu.concatenate %6, %77 in 0 : vector<2x4xf32>, vector<15x4xf32> -> vector<17x4xf32>
    %79 = vector.extract_strided_slice %78 {offsets = [0, 0], sizes = [15, 4], strides = [1, 1]} : vector<17x4xf32> to vector<15x4xf32>
    %80 = vector.extract_strided_slice %78 {offsets = [1, 0], sizes = [15, 4], strides = [1, 1]} : vector<17x4xf32> to vector<15x4xf32>
    %81 = vector.extract_strided_slice %78 {offsets = [2, 0], sizes = [15, 4], strides = [1, 1]} : vector<17x4xf32> to vector<15x4xf32>
    %82 = tpu.concatenate %79, %80, %81 in 1 : vector<15x4xf32>, vector<15x4xf32>, vector<15x4xf32> -> vector<15x12xf32>
    %cst_34 = arith.constant dense<0.000000e+00> : vector<15x4xf32>
    %83 = tpu.matmul %82, %0, %cst_34 {dimension_numbers = #tpu.dot_dimension_numbers<[1], [0], [0], [1], [0, 0, 1, 1], [], []>} : vector<15x12xf32>, vector<12x4xf32>, vector<15x4xf32> -> vector<15x4xf32>
    %84 = vector.broadcast %1 : vector<1x4xf32> to vector<15x4xf32>
    %85 = arith.addf %83, %84 : vector<15x4xf32>
    %86 = vector.shape_cast %85 : vector<15x4xf32> to vector<1x15x4xf32>
    %cst_35 = arith.constant dense<0.000000e+00> : vector<1xf32>
    %87 = vector.multi_reduction <add>, %86, %cst_35 [1, 2] : vector<1x15x4xf32> to vector<1xf32>
    %88 = vector.shape_cast %87 : vector<1xf32> to vector<1x1x1xf32>
    %89 = vector.extract %88[0, 0, 0] : f32 from vector<1x1x1xf32>
    %cst_36 = arith.constant 0.0166666675 : f32
    %90 = arith.mulf %89, %cst_36 : f32
    %91 = arith.mulf %85, %85 : vector<15x4xf32>
    %92 = vector.shape_cast %91 : vector<15x4xf32> to vector<1x15x4xf32>
    %cst_37 = arith.constant dense<0.000000e+00> : vector<1xf32>
    %93 = vector.multi_reduction <add>, %92, %cst_37 [1, 2] : vector<1x15x4xf32> to vector<1xf32>
    %94 = vector.shape_cast %93 : vector<1xf32> to vector<1x1x1xf32>
    %95 = vector.extract %94[0, 0, 0] : f32 from vector<1x1x1xf32>
    %cst_38 = arith.constant 0.0166666675 : f32
    %96 = arith.mulf %95, %cst_38 : f32
    %97 = arith.mulf %90, %90 : f32
    %98 = arith.subf %96, %97 : f32
    %99 = vector.broadcast %90 : f32 to vector<15x4xf32>
    %100 = arith.subf %85, %99 : vector<15x4xf32>
    %cst_39 = arith.constant 9.99999974E-6 : f32
    %101 = arith.addf %98, %cst_39 : f32
    %102 = math.rsqrt %101 : f32
    %103 = vector.broadcast %102 : f32 to vector<15x4xf32>
    %104 = arith.mulf %100, %103 : vector<15x4xf32>
    %105 = arith.mulf %104, %2 : vector<15x4xf32>
    %106 = arith.addf %105, %3 : vector<15x4xf32>
    %cst_40 = arith.constant 0.000000e+00 : f32
    %107 = vector.broadcast %cst_40 : f32 to vector<15x4xf32>
    %108 = arith.maximumf %106, %107 : vector<15x4xf32>
    %109 = tpu.concatenate %7, %108 in 0 : vector<4x4xf32>, vector<15x4xf32> -> vector<19x4xf32>
    %110 = vector.extract_strided_slice %109 {offsets = [0, 0], sizes = [15, 4], strides = [1, 1]} : vector<19x4xf32> to vector<15x4xf32>
    %111 = vector.extract_strided_slice %109 {offsets = [2, 0], sizes = [15, 4], strides = [1, 1]} : vector<19x4xf32> to vector<15x4xf32>
    %112 = vector.extract_strided_slice %109 {offsets = [4, 0], sizes = [15, 4], strides = [1, 1]} : vector<19x4xf32> to vector<15x4xf32>
    %113 = tpu.concatenate %110, %111, %112 in 1 : vector<15x4xf32>, vector<15x4xf32>, vector<15x4xf32> -> vector<15x12xf32>
    %cst_41 = arith.constant dense<0.000000e+00> : vector<15x4xf32>
    %114 = tpu.matmul %113, %0, %cst_41 {dimension_numbers = #tpu.dot_dimension_numbers<[1], [0], [0], [1], [0, 0, 1, 1], [], []>} : vector<15x12xf32>, vector<12x4xf32>, vector<15x4xf32> -> vector<15x4xf32>
    %115 = vector.broadcast %1 : vector<1x4xf32> to vector<15x4xf32>
    %116 = arith.addf %114, %115 : vector<15x4xf32>
    %117 = vector.shape_cast %116 : vector<15x4xf32> to vector<1x15x4xf32>
    %cst_42 = arith.constant dense<0.000000e+00> : vector<1xf32>
    %118 = vector.multi_reduction <add>, %117, %cst_42 [1, 2] : vector<1x15x4xf32> to vector<1xf32>
    %119 = vector.shape_cast %118 : vector<1xf32> to vector<1x1x1xf32>
    %120 = vector.extract %119[0, 0, 0] : f32 from vector<1x1x1xf32>
    %cst_43 = arith.constant 0.0166666675 : f32
    %121 = arith.mulf %120, %cst_43 : f32
    %122 = arith.mulf %116, %116 : vector<15x4xf32>
    %123 = vector.shape_cast %122 : vector<15x4xf32> to vector<1x15x4xf32>
    %cst_44 = arith.constant dense<0.000000e+00> : vector<1xf32>
    %124 = vector.multi_reduction <add>, %123, %cst_44 [1, 2] : vector<1x15x4xf32> to vector<1xf32>
    %125 = vector.shape_cast %124 : vector<1xf32> to vector<1x1x1xf32>
    %126 = vector.extract %125[0, 0, 0] : f32 from vector<1x1x1xf32>
    %cst_45 = arith.constant 0.0166666675 : f32
    %127 = arith.mulf %126, %cst_45 : f32
    %128 = arith.mulf %121, %121 : f32
    %129 = arith.subf %127, %128 : f32
    %130 = vector.broadcast %121 : f32 to vector<15x4xf32>
    %131 = arith.subf %116, %130 : vector<15x4xf32>
    %cst_46 = arith.constant 9.99999974E-6 : f32
    %132 = arith.addf %129, %cst_46 : f32
    %133 = math.rsqrt %132 : f32
    %134 = vector.broadcast %133 : f32 to vector<15x4xf32>
    %135 = arith.mulf %131, %134 : vector<15x4xf32>
    %136 = arith.mulf %135, %4 : vector<15x4xf32>
    %137 = arith.addf %136, %5 : vector<15x4xf32>
    %cst_47 = arith.constant 0.000000e+00 : f32
    %138 = vector.broadcast %cst_47 : f32 to vector<15x4xf32>
    %139 = arith.maximumf %137, %138 : vector<15x4xf32>
    %140 = arith.addf %77, %139 : vector<15x4xf32>
    %c1_48 = arith.constant 1 : index
    %c0_49 = arith.constant 0 : index
    %c0_50 = arith.constant 0 : index
    %141 = vector.load %arg8[%c1_48, %c0_49, %c0_50] : memref<2x15x4xf32, #tpu.memory_space<vmem>>, vector<1x15x4xf32>
    %142 = vector.shape_cast %141 : vector<1x15x4xf32> to vector<15x4xf32>
    %143 = vector.shape_cast %140 : vector<15x4xf32> to vector<1x15x4xf32>
    tpu.vector_store %arg8[%c1_48, %c0_49, %c0_50], %143 {strides = array<i32>} : memref<2x15x4xf32, #tpu.memory_space<vmem>>, vector<1x15x4xf32>,
    return
  }
  func.func @transform_0(%arg0: i32) -> (i32, i32, i32) {
    %c0_i32 = arith.constant 0 : i32
    %c0_i32_0 = arith.constant 0 : i32
    %c0_i32_1 = arith.constant 0 : i32
    return %arg0, %c0_i32, %c0_i32_0 : i32, i32, i32
  }
  func.func @transform_1(%arg0: i32) -> (i32, i32) {
    %c0_i32 = arith.constant 0 : i32
    %c0_i32_0 = arith.constant 0 : i32
    %c0_i32_1 = arith.constant 0 : i32
    return %c0_i32, %c0_i32_0 : i32, i32
  }
  func.func @transform_2(%arg0: i32) -> (i32, i32) {
    %c0_i32 = arith.constant 0 : i32
    %c0_i32_0 = arith.constant 0 : i32
    %c0_i32_1 = arith.constant 0 : i32
    return %c0_i32, %c0_i32_0 : i32, i32
  }
  func.func @transform_3(%arg0: i32) -> (i32, i32) {
    %c0_i32 = arith.constant 0 : i32
    %c0_i32_0 = arith.constant 0 : i32
    %c0_i32_1 = arith.constant 0 : i32
    return %c0_i32, %c0_i32_0 : i32, i32
  }
  func.func @transform_4(%arg0: i32) -> (i32, i32) {
    %c0_i32 = arith.constant 0 : i32
    %c0_i32_0 = arith.constant 0 : i32
    %c0_i32_1 = arith.constant 0 : i32
    return %c0_i32, %c0_i32_0 : i32, i32
  }
  func.func @transform_5(%arg0: i32) -> (i32, i32) {
    %c0_i32 = arith.constant 0 : i32
    %c0_i32_0 = arith.constant 0 : i32
    %c0_i32_1 = arith.constant 0 : i32
    return %c0_i32, %c0_i32_0 : i32, i32
  }
  func.func @transform_6(%arg0: i32) -> (i32, i32) {
    %c0_i32 = arith.constant 0 : i32
    %c0_i32_0 = arith.constant 0 : i32
    %c0_i32_1 = arith.constant 0 : i32
    return %c0_i32, %c0_i32_0 : i32, i32
  }
  func.func @transform_7(%arg0: i32) -> (i32, i32, i32) {
    %c0_i32 = arith.constant 0 : i32
    %c0_i32_0 = arith.constant 0 : i32
    %c0_i32_1 = arith.constant 0 : i32
    return %arg0, %c0_i32, %c0_i32_0 : i32, i32, i32
  }
}

</mosaic_0001>

<llo_original>
// kernel: tpu_custom_call.1
$region0: #{tpu_custom_call.1}
  #allocation0 [shape = 'u32[]', space=smem, size = 0x4, offset = 0x4, fixed_abs, tag = 'smem constant byte address 0x4 - core index']
  #allocation1 [shape = 'u32[144,128]{1,0:T(1,128)}', space=vmem, size = 0x12000, scoped, tag = 'internal scratch']
  %s0 = inlined_call_operand.vmem [shape: f32[4,15,4], index: 0, kind: input, shape index: {}]
  %s1 = inlined_call_operand.vmem [shape: f32[12,4], index: 1, kind: input, shape index: {}]
  %s2 = inlined_call_operand.vmem [shape: f32[1,4], index: 2, kind: input, shape index: {}]
  %s3 = inlined_call_operand.vmem [shape: f32[15,4], index: 3, kind: input, shape index: {}]
  %s4 = inlined_call_operand.vmem [shape: f32[15,4], index: 4, kind: input, shape index: {}]
  %s5 = inlined_call_operand.vmem [shape: f32[15,4], index: 5, kind: input, shape index: {}]
  %s6 = inlined_call_operand.vmem [shape: f32[15,4], index: 6, kind: input, shape index: {}]
  %s7 = inlined_call_operand.vmem [shape: f32[4,15,4], index: 7, kind: output, shape index: {}]
  %s8 = sld [smem:[#allocation0]]
  $region61: #{tpu_custom_call.1} parent=0
    _
  %s10 = ssub.s32 1, %s8
  %s11 = scalar_select 0, %s10, %s8
  loop: start=0, step=1, limit=4
  $region2: #{tpu_custom_call.1} parent=0 // loop_pre_header
    _
  $region3: #{tpu_custom_call.1} parent=0 // loop_header
    %s13 = sphi 0, %s17
    %p14 = scmp.ge.s32.totalorder %s13, 4
    %s23 = sphi 0, %s25
    %s26 = sphi 0, %s23
    %s27 = sphi 0, %s26
    %s43 = sphi 0, %s27
    %s47 = sphi 0, %s47
    %s49 = sphi 0, %s47
    %s50 = sphi 0, %s49
    %s64 = sphi 0, %s50
    %s68 = sphi 0, %s68
    %s70 = sphi 0, %s68
    %s71 = sphi 0, %s70
    %s85 = sphi 0, %s71
    %s89 = sphi 0, %s89
    %s91 = sphi 0, %s89
    %s92 = sphi 0, %s91
    %s106 = sphi 0, %s92
    %s110 = sphi 0, %s110
    %s112 = sphi 0, %s110
    %s113 = sphi 0, %s112
    %s127 = sphi 0, %s113
    %s131 = sphi 0, %s131
    %s133 = sphi 0, %s131
    %s134 = sphi 0, %s133
    %s148 = sphi 0, %s134
    %s152 = sphi 0, %s152
    %s154 = sphi 0, %s152
    %s155 = sphi 0, %s154
    %s169 = sphi 0, %s155
    %s175 = sphi 0, %s177
    %s178 = sphi 0, %s175
    %s179 = sphi 0, %s178
    %s195 = sphi 0, %s179
  $region4: #{tpu_custom_call.1} parent=0 // loop_header_branch
    %16 = sbr.rel (%p14) target = $region8
  $region5: #{tpu_custom_call.1} parent=0 // loop_body
    %s18 = ssub.s32 %s13, 1
    %s19 = ssub.s32 %s13, 2
    %s20 = sadd.s32 %s13, 1
    %s21 = ssub.s32 %s13, %s20
    %p22 = scmp.eq.s32.totalorder %s21, 0
    %s24 = sadd.s32 %s23, 1
    %s25 = scalar_select %p22, %s23, %s24
    %p28 = pneg %p22
    %p29 = scmp.eq.s32.totalorder %s13, 1
    %p30 = por %p28, %p29
    %p31 = scmp.ne.s32.totalorder %s23, %s26
    %p32 = scmp.eq.s32.totalorder %s13, 0
    %p33 = por %p31, %p32
    %p34 = scmp.ne.s32.totalorder %s23, %s26
    %p35 = scmp.eq.s32.totalorder %s18, 1
    %p36 = por %p34, %p35
    %p37 = scmp.ne.s32.totalorder %s26, %s27
    %p38 = scmp.eq.s32.totalorder %s18, 0
    %p39 = por %p37, %p38
    %p40 = scmp.ne.s32.totalorder %s26, %s27
    %p41 = scmp.eq.s32.totalorder %s19, 1
    %p42 = por %p40, %p41
    %p44 = scmp.ne.s32.totalorder %s27, %s43
    %p45 = scmp.eq.s32.totalorder %s19, 0
    %p46 = por %p44, %p45
    %s48 = sadd.s32 %s47, 1
    %p51 = scmp.eq.s32.totalorder %s13, 1
    %p52 = scmp.ne.s32.totalorder %s47, %s49
    %p53 = scmp.eq.s32.totalorder %s13, 0
    %p54 = por %p52, %p53
    %p55 = scmp.ne.s32.totalorder %s47, %s49
    %p56 = scmp.eq.s32.totalorder %s18, 1
    %p57 = por %p55, %p56
    %p58 = scmp.ne.s32.totalorder %s49, %s50
    %p59 = scmp.eq.s32.totalorder %s18, 0
    %p60 = por %p58, %p59
    %p61 = scmp.ne.s32.totalorder %s49, %s50
    %p62 = scmp.eq.s32.totalorder %s19, 1
    %p63 = por %p61, %p62
    %p65 = scmp.ne.s32.totalorder %s50, %s64
    %p66 = scmp.eq.s32.totalorder %s19, 0
    %p67 = por %p65, %p66
    %s69 = sadd.s32 %s68, 1
    %p72 = scmp.eq.s32.totalorder %s13, 1
    %p73 = scmp.ne.s32.totalorder %s68, %s70
    %p74 = scmp.eq.s32.totalorder %s13, 0
    %p75 = por %p73, %p74
    %p76 = scmp.ne.s32.totalorder %s68, %s70
    %p77 = scmp.eq.s32.totalorder %s18, 1
    %p78 = por %p76, %p77
    %p79 = scmp.ne.s32.totalorder %s70, %s71
    %p80 = scmp.eq.s32.totalorder %s18, 0
    %p81 = por %p79, %p80
    %p82 = scmp.ne.s32.totalorder %s70, %s71
    %p83 = scmp.eq.s32.totalorder %s19, 1
    %p84 = por %p82, %p83
    %p86 = scmp.ne.s32.totalorder %s71, %s85
    %p87 = scmp.eq.s32.totalorder %s19, 0
    %p88 = por %p86, %p87
    %s90 = sadd.s32 %s89, 1
    %p93 = scmp.eq.s32.totalorder %s13, 1
    %p94 = scmp.ne.s32.totalorder %s89, %s91
    %p95 = scmp.eq.s32.totalorder %s13, 0
    %p96 = por %p94, %p95
    %p97 = scmp.ne.s32.totalorder %s89, %s91
    %p98 = scmp.eq.s32.totalorder %s18, 1
    %p99 = por %p97, %p98
    %p100 = scmp.ne.s32.totalorder %s91, %s92
    %p101 = scmp.eq.s32.totalorder %s18, 0
    %p102 = por %p100, %p101
    %p103 = scmp.ne.s32.totalorder %s91, %s92
    %p104 = scmp.eq.s32.totalorder %s19, 1
    %p105 = por %p103, %p104
    %p107 = scmp.ne.s32.totalorder %s92, %s106
    %p108 = scmp.eq.s32.totalorder %s19, 0
    %p109 = por %p107, %p108
    %s111 = sadd.s32 %s110, 1
    %p114 = scmp.eq.s32.totalorder %s13, 1
    %p115 = scmp.ne.s32.totalorder %s110, %s112
    %p116 = scmp.eq.s32.totalorder %s13, 0
    %p117 = por %p115, %p116
    %p118 = scmp.ne.s32.totalorder %s110, %s112
    %p119 = scmp.eq.s32.totalorder %s18, 1
    %p120 = por %p118, %p119
    %p121 = scmp.ne.s32.totalorder %s112, %s113
    %p122 = scmp.eq.s32.totalorder %s18, 0
    %p123 = por %p121, %p122
    %p124 = scmp.ne.s32.totalorder %s112, %s113
    %p125 = scmp.eq.s32.totalorder %s19, 1
    %p126 = por %p124, %p125
    %p128 = scmp.ne.s32.totalorder %s113, %s127
    %p129 = scmp.eq.s32.totalorder %s19, 0
    %p130 = por %p128, %p129
    %s132 = sadd.s32 %s131, 1
    %p135 = scmp.eq.s32.totalorder %s13, 1
    %p136 = scmp.ne.s32.totalorder %s131, %s133
    %p137 = scmp.eq.s32.totalorder %s13, 0
    %p138 = por %p136, %p137
    %p139 = scmp.ne.s32.totalorder %s131, %s133
    %p140 = scmp.eq.s32.totalorder %s18, 1
    %p141 = por %p139, %p140
    %p142 = scmp.ne.s32.totalorder %s133, %s134
    %p143 = scmp.eq.s32.totalorder %s18, 0
    %p144 = por %p142, %p143
    %p145 = scmp.ne.s32.totalorder %s133, %s134
    %p146 = scmp.eq.s32.totalorder %s19, 1
    %p147 = por %p145, %p146
    %p149 = scmp.ne.s32.totalorder %s134, %s148
    %p150 = scmp.eq.s32.totalorder %s19, 0
    %p151 = por %p149, %p150
    %s153 = sadd.s32 %s152, 1
    %p156 = scmp.eq.s32.totalorder %s13, 1
    %p157 = scmp.ne.s32.totalorder %s152, %s154
    %p158 = scmp.eq.s32.totalorder %s13, 0
    %p159 = por %p157, %p158
    %p160 = scmp.ne.s32.totalorder %s152, %s154
    %p161 = scmp.eq.s32.totalorder %s18, 1
    %p162 = por %p160, %p161
    %p163 = scmp.ne.s32.totalorder %s154, %s155
    %p164 = scmp.eq.s32.totalorder %s18, 0
    %p165 = por %p163, %p164
    %p166 = scmp.ne.s32.totalorder %s154, %s155
    %p167 = scmp.eq.s32.totalorder %s19, 1
    %p168 = por %p166, %p167
    %p170 = scmp.ne.s32.totalorder %s155, %s169
    %p171 = scmp.eq.s32.totalorder %s19, 0
    %p172 = por %p170, %p171
    %s173 = ssub.s32 %s13, %s20
    %p174 = scmp.eq.s32.totalorder %s173, 0
    %s176 = sadd.s32 %s175, 1
    %s177 = scalar_select %p174, %s175, %s176
    %p180 = pneg %p174
    %p181 = scmp.eq.s32.totalorder %s13, 1
    %p182 = por %p180, %p181
    %p183 = scmp.ne.s32.totalorder %s175, %s178
    %p184 = scmp.eq.s32.totalorder %s13, 0
    %p185 = por %p183, %p184
    %p186 = scmp.ne.s32.totalorder %s175, %s178
    %p187 = scmp.eq.s32.totalorder %s18, 1
    %p188 = por %p186, %p187
    %p189 = scmp.ne.s32.totalorder %s178, %s179
    %p190 = scmp.eq.s32.totalorder %s18, 0
    %p191 = por %p189, %p190
    %p192 = scmp.ne.s32.totalorder %s178, %s179
    %p193 = scmp.eq.s32.totalorder %s19, 1
    %p194 = por %p192, %p193
    %p196 = scmp.ne.s32.totalorder %s179, %s195
    %p197 = scmp.eq.s32.totalorder %s19, 0
    %p198 = por %p196, %p197
    %p199 = scmp.le.s32.totalorder 1, %s13
    %p200 = scmp.lt.s32.totalorder %s13, 3
    %p201 = pnand %p199, %p200
    %p202 = pneg %p201
    // Predicated region
    $region9: #{tpu_custom_call.1} parent=5 // pred_check
      _
    $region10: #{tpu_custom_call.1} parent=5 // pred_check_branch
      %204 = sbr.rel (%p201) target = $region12
    $region11: #{tpu_custom_call.1} parent=5 // pred_region
      %s205 = ssub.s32 %s13, 1
      // Predicated region
      $region13: #{tpu_custom_call.1} parent=11 // pred_check
        %p206 = pneg %p60
      $region14: #{tpu_custom_call.1} parent=11 // pred_check_branch
        %208 = sbr.rel (%p206) target = $region16
      $region15: #{tpu_custom_call.1} parent=11 // pred_region
        _
      $region16: #{tpu_custom_call.1} parent=11 // pred_fallthru
        _
      // Predicated region
      $region17: #{tpu_custom_call.1} parent=11 // pred_check
        %p209 = pneg %p81
      $region18: #{tpu_custom_call.1} parent=11 // pred_check_branch
        %211 = sbr.rel (%p209) target = $region20
      $region19: #{tpu_custom_call.1} parent=11 // pred_region
        _
      $region20: #{tpu_custom_call.1} parent=11 // pred_fallthru
        _
      // Predicated region
      $region21: #{tpu_custom_call.1} parent=11 // pred_check
        %p212 = pneg %p102
      $region22: #{tpu_custom_call.1} parent=11 // pred_check_branch
        %214 = sbr.rel (%p212) target = $region24
      $region23: #{tpu_custom_call.1} parent=11 // pred_region
        _
      $region24: #{tpu_custom_call.1} parent=11 // pred_fallthru
        _
      // Predicated region
      $region25: #{tpu_custom_call.1} parent=11 // pred_check
        %p215 = pneg %p123
      $region26: #{tpu_custom_call.1} parent=11 // pred_check_branch
        %217 = sbr.rel (%p215) target = $region28
      $region27: #{tpu_custom_call.1} parent=11 // pred_region
        _
      $region28: #{tpu_custom_call.1} parent=11 // pred_fallthru
        _
      // Predicated region
      $region29: #{tpu_custom_call.1} parent=11 // pred_check
        %p218 = pneg %p144
      $region30: #{tpu_custom_call.1} parent=11 // pred_check_branch
        %220 = sbr.rel (%p218) target = $region32
      $region31: #{tpu_custom_call.1} parent=11 // pred_region
        _
      $region32: #{tpu_custom_call.1} parent=11 // pred_fallthru
        _
      // Predicated region
      $region33: #{tpu_custom_call.1} parent=11 // pred_check
        %p221 = pneg %p165
      $region34: #{tpu_custom_call.1} parent=11 // pred_check_branch
        %223 = sbr.rel (%p221) target = $region36
      $region35: #{tpu_custom_call.1} parent=11 // pred_region
        _
      $region36: #{tpu_custom_call.1} parent=11 // pred_fallthru
        _
    $region12: #{tpu_custom_call.1} parent=5 // pred_fallthru
      _
    %p224 = scmp.lt.s32.totalorder %s13, 2
    // Predicated region
    $region37: #{tpu_custom_call.1} parent=5 // pred_check
      %p225 = pneg %p224
    $region38: #{tpu_custom_call.1} parent=5 // pred_check_branch
      %227 = sbr.rel (%p225) target = $region40
    $region39: #{tpu_custom_call.1} parent=5 // pred_region
      // Predicated region
      $region41: #{tpu_custom_call.1} parent=39 // pred_check
        %p228 = pneg %p33
      $region42: #{tpu_custom_call.1} parent=39 // pred_check_branch
        %230 = sbr.rel (%p228) target = $region44
      $region43: #{tpu_custom_call.1} parent=39 // pred_region
        %s231 = smul.u32 2, %s13
        %p232 = scmp.lt.s32.totalorder %s231, 3
        %s233 = scalar_select %p232, %s231, 3
        %s234 = smul.addr %s233, 2
        %s235 = smul.addr %s234, 8
        %s236 = scalar_lea.vmem %s0, %s235
        %s237 = smul.u32 2, %s13
      $region44: #{tpu_custom_call.1} parent=39 // pred_fallthru
        _
    $region40: #{tpu_custom_call.1} parent=5 // pred_fallthru
      _
    %p238 = scmp.le.s32.totalorder 1, %s13
    %p239 = scmp.lt.s32.totalorder %s13, 3
    %p240 = pnand %p238, %p239
    %p241 = pneg %p240
    // Predicated region
    $region45: #{tpu_custom_call.1} parent=5 // pred_check
      _
    $region46: #{tpu_custom_call.1} parent=5 // pred_check_branch
      %243 = sbr.rel (%p240) target = $region48
    $region47: #{tpu_custom_call.1} parent=5 // pred_region
      %s244 = ssub.s32 %s13, 1
      %s245 = smul.u32 2, %s18
      %p246 = scmp.lt.s32.totalorder %s245, 3
      %s247 = scalar_select %p246, %s245, 3
      %s248 = smul.addr %s247, 2
      %s249 = smul.addr %s248, 8
      %s250 = scalar_lea.vmem %s0, %s249
      %p251 = pneg %p39
      %p252 = pneg %p36
      %p253 = pneg %p60
      %p254 = pneg %p57
      %p255 = pneg %p81
      %p256 = pneg %p78
      %p257 = pneg %p102
      %p258 = pneg %p99
      %p259 = pneg %p123
      %p260 = pneg %p120
      %p261 = pneg %p144
      %p262 = pneg %p141
      %p263 = pneg %p165
      %p264 = pneg %p162
      %p265 = pneg %p191
      %p266 = pneg %p188
      %s267 = smul.u32 2, %s18
      %p268 = scmp.lt.s32.totalorder %s267, 3
      %s269 = scalar_select %p268, %s267, 3
      %s270 = smul.addr %s269, 2
      %s271 = smul.addr %s270, 8
      %s272 = scalar_lea.vmem %s7, %s271
      %s273 = smul.u32 2, %s18
      %p274 = scmp.lt.s32.totalorder %s273, 3
      %s275 = scalar_select %p274, %s273, 3
      %s276 = smul.addr %s275, 2
      %s277 = smul.addr %s276, 8
      %s278 = scalar_lea.vmem %s0, %s277
      %s279 = smul.u32 2, %s18
      %s280 = smul.u32 2, %s18
      %p281 = scmp.lt.s32.totalorder %s280, 3
      %s282 = scalar_select %p281, %s280, 3
      %s283 = smul.addr %s282, 2
      %s284 = smul.addr %s283, 8
      %s285 = scalar_lea.vmem %s7, %s284
      %s286 = smul.u32 2, %s18
      %v287 = vld [vmem:[%s1] sm:$0xff]
      %v288 = vld [vmem:[%s1 + $0x8] sm:$0xf]
      %v289 = vld [vmem:[%s2] sm:$0x1]
      %v290 = vld [vmem:[%s3] sm:$0xff]
      %v291 = vld [vmem:[%s3 + $0x8] sm:$0x7f]
      %v292 = vld [vmem:[%s4] sm:$0xff]
      %v293 = vld [vmem:[%s4 + $0x8] sm:$0x7f]
      %v294 = vld [vmem:[%s5] sm:$0xff]
      %v295 = vld [vmem:[%s5 + $0x8] sm:$0x7f]
      %v296 = vld [vmem:[%s6] sm:$0xff]
      %v297 = vld [vmem:[%s6 + $0x8] sm:$0x7f]
      %v298 = vld [vmem:[%s278] sm:$0xff]
      %v299 = vld [vmem:[%s278 + $0x8] sm:$0x7f]
      %vm302 = vcmask 1041408
      %v303 = vrot.slane %v298, 6
      %v304 = vrot.slane %v299, 6
      %v305 = vsel %vm302, %v303, %v304
      %v308 = vsel %vm302, 0.0, %v303
      %vm310 = vcmask 1046528
      %v311 = vrot.slane %v308, 1
      %v312 = vrot.slane %v305, 1
      %v313 = vsel %vm310, %v311, %v312
      %314 = vrot.lane.b32.xlu0 %v313, 4
      %v315 = vpop.permute.xlu0 %314
      %316 = vrot.lane.b32.xlu0 %v312, 4
      %v317 = vpop.permute.xlu0 %316
      %vm320 = vcmask 1045504
      %v321 = vrot.slane %v308, 2
      %v322 = vrot.slane %v305, 2
      %v323 = vsel %vm320, %v321, %v322
      %v324 = vrot.slane %v304, 2
      %v325 = vsel %vm320, %v322, %v324
      %326 = vrot.lane.b32.xlu0 %v323, 8
      %v327 = vpop.permute.xlu0 %326
      %328 = vrot.lane.b32.xlu0 %v325, 8
      %v329 = vpop.permute.xlu0 %328
      %vm332 = vcmask 31744
      %v333 = vsel %vm332, %v308, %v315
      %v334 = vsel %vm332, %v305, %v317
      %vm335 = vcmask 64512
      %v336 = vsel %vm335, %v333, %v327
      %v337 = vsel %vm335, %v334, %v329
      %v339 = vlaneseq
      %v340 = vshrl.u32 %v339, 7
      %v341 = vsub.s32 0, %v340
      %v342 = vrot.slane %v289, %v341
      %vm344 = vcmask 97280
      %v346 = vsel %vm344, %v336, 0
      %v349 = vsel %vm344, %v337, 0
      %vm351 = vcmask 1043456
      %v353 = vsel %vm351, %v288, 0
      %355 = vmatprep.subr.mxu0 0.0
      %356 = vmatpush1.msra.mxu0 %v287
      %357 = vmatprep.subr.mxu0 0.0
      %358 = vmatpush1.msra.mxu0 %v353
      %359 = vmatprep.subr.mxu0 0.0
      %360 = vmatpush1.msra.mxu0 0.0
      %361 = vmatprep.subr.mxu0 0.0
      %362 = vmatpush1.msra.mxu0 0.0
      %363 = vmatprep.subr.mxu0 0.0
      %364 = vmatpush1.msra.mxu0 0.0
      %365 = vmatprep.subr.mxu0 0.0
      %366 = vmatpush1.msra.mxu0 0.0
      %367 = vmatprep.subr.mxu0 0.0
      %368 = vmatpush1.msra.mxu0 0.0
      %369 = vmatprep.subr.mxu0 0.0
      %370 = vmatpush1.msra.mxu0 0.0
      %371 = vmatprep.subr.mxu0 0.0
      %372 = vmatpush1.msra.mxu0 0.0
      %373 = vmatprep.subr.mxu0 0.0
      %374 = vmatpush1.msra.mxu0 0.0
      %375 = vmatprep.subr.mxu0 0.0
      %376 = vmatpush1.msra.mxu0 0.0
      %377 = vmatprep.subr.mxu0 0.0
      %378 = vmatpush1.msra.mxu0 0.0
      %379 = vmatprep.subr.mxu0 0.0
      %380 = vmatpush1.msra.mxu0 0.0
      %381 = vmatprep.subr.mxu0 0.0
      %382 = vmatpush1.msra.mxu0 0.0
      %383 = vmatprep.subr.mxu0 0.0
      %384 = vmatpush1.msra.mxu0 0.0
      %385 = vmatprep.subr.mxu0 0.0
      %386 = vmatpush1.msra.mxu0 0.0
      %387 = vmatprep.subr.mxu0 0.0
      %388 = vmatpush1.msra.mxu0 0.0
      %389 = vmatprep.subr.mxu0 0.0
      %390 = vmatpush1.msra.mxu0 0.0
      %391 = vmatprep.subr.mxu0 0.0
      %392 = vmatpush1.msra.mxu0 0.0
      %393 = vmatprep.subr.mxu0 0.0
      %394 = vmatpush1.msra.mxu0 0.0
      %395 = vmatprep.subr.mxu0 0.0
      %396 = vmatpush1.msra.mxu0 0.0
      %397 = vmatprep.subr.mxu0 0.0
      %398 = vmatpush1.msra.mxu0 0.0
      %399 = vmatprep.subr.mxu0 0.0
      %400 = vmatpush1.msra.mxu0 0.0
      %401 = vmatprep.subr.mxu0 0.0
      %402 = vmatpush1.msra.mxu0 0.0
      %403 = vmatprep.subr.mxu0 0.0
      %404 = vmatpush1.msra.mxu0 0.0
      %405 = vmatprep.subr.mxu0 0.0
      %406 = vmatpush1.msra.mxu0 0.0
      %407 = vmatprep.subr.mxu0 0.0
      %408 = vmatpush1.msra.mxu0 0.0
      %409 = vmatprep.subr.mxu0 0.0
      %410 = vmatpush1.msra.mxu0 0.0
      %411 = vmatprep.subr.mxu0 0.0
      %412 = vmatpush1.msra.mxu0 0.0
      %413 = vmatprep.subr.mxu0 0.0
      %414 = vmatpush1.msra.mxu0 0.0
      %415 = vmatprep.subr.mxu0 0.0
      %416 = vmatpush1.msra.mxu0 0.0
      %417 = vmatprep.subr.mxu0 0.0
      %418 = vmatpush1.msra.mxu0 0.0
      %419 = vmatprep.mubr.f32.mxu0 0.0
      %420 = vmatmul.mubr.f32.gmra.mrb[0].mxu0 %v346
      %v421 = vpop.f32.mrb[0].mxu0
      %v422 = vadd.f32 %v342, %v421
      %v423 = vpop.f32.mrb[0].mxu0
      %424 = vmatprep.mubr.f32.mxu0 0.0
      %425 = vmatmul.mubr.f32.gmra.mrb[0].mxu0 %v349
      %v426 = vpop.f32.mrb[0].mxu0
      %v427 = vadd.f32 %v342, %v426
      %v428 = vpop.f32.mrb[0].mxu0
      %429 = vdwg.mxu0
      %v430 = vsel %vm332, %v422, 0.0
      %vm431 = vcmask 30720
      %v432 = vsel %vm431, %v427, 0.0
      %v433 = vadd.f32 %v430, %v432
      %434 = vadd.xlane.f32.xlu0 %v433
      %v435 = vpop.xlane.xlu0 %434
      %v436 = vrot.slane %v435, 4
      %v437 = vadd.f32 %v435, %v436
      %v438 = vrot.slane %v437, 2
      %v439 = vadd.f32 %v437, %v438
      %v440 = vrot.slane %v439, 1
      %v441 = vadd.f32 %v439, %v440
      %s442 = vtos %v441
      %s443 = smul.f32 %s442, 0.016666668
      %v444 = vmul.f32 %v422, %v422
      %v445 = vmul.f32 %v427, %v427
      %v446 = vsel %vm332, %v444, 0.0
      %v447 = vsel %vm431, %v445, 0.0
      %v448 = vadd.f32 %v446, %v447
      %449 = vadd.xlane.f32.xlu0 %v448
      %v450 = vpop.xlane.xlu0 %449
      %v451 = vrot.slane %v450, 4
      %v452 = vadd.f32 %v450, %v451
      %v453 = vrot.slane %v452, 2
      %v454 = vadd.f32 %v452, %v453
      %v455 = vrot.slane %v454, 1
      %v456 = vadd.f32 %v454, %v455
      %s457 = vtos %v456
      %s458 = smul.f32 %s457, 0.016666668
      %s459 = smul.f32 %s443, %s443
      %s460 = ssub.f32 %s458, %s459
      %v461 = vstv %s443
      %v462 = vsub.f32 %v422, %v461
      %v463 = vsub.f32 %v427, %v461
      %s464 = sadd.f32 %s460, 1e-05
      %v465 = vstv %s464
      %v466 = vrsqrt.pop %v465
      %s467 = vtos %v466
      %v468 = vstv %s467
      %v469 = vmul.f32 %v462, %v468
      %v470 = vmul.f32 %v463, %v468
      %v471 = vmul.f32 %v469, %v290
      %v472 = vmul.f32 %v470, %v291
      %v473 = vadd.f32 %v471, %v292
      %v474 = vadd.f32 %v472, %v293
      %v475 = vmax.f32 %v473, 0.0
      %v476 = vmax.f32 %v474, 0.0
      %v479 = vrot.slane %v475, 4
      %v480 = vrot.slane %v476, 4
      %v481 = vsel %vm351, %v479, %v480
      %v484 = vsel %vm351, 0.0, %v479
      %v486 = vrot.slane %v484, 2
      %v487 = vrot.slane %v481, 2
      %v488 = vsel %vm320, %v486, %v487
      %v489 = vrot.slane %v480, 2
      %v490 = vsel %vm320, %v487, %v489
      %491 = vrot.lane.b32.xlu0 %v488, 4
      %v492 = vpop.permute.xlu0 %491
      %493 = vrot.lane.b32.xlu0 %v490, 4
      %v494 = vpop.permute.xlu0 %493
      %v497 = vrot.slane %v484, 4
      %v498 = vrot.slane %v481, 4
      %v499 = vsel %vm351, %v497, %v498
      %v500 = vrot.slane %v480, 4
      %v501 = vsel %vm351, %v498, %v500
      %502 = vrot.lane.b32.xlu0 %v499, 8
      %v503 = vpop.permute.xlu0 %502
      %504 = vrot.lane.b32.xlu0 %v501, 8
      %v505 = vpop.permute.xlu0 %504
      %v508 = vsel %vm332, %v484, %v492
      %v509 = vsel %vm332, %v481, %v494
      %v510 = vsel %vm335, %v508, %v503
      %v511 = vsel %vm335, %v509, %v505
      %v513 = vsel %vm344, %v510, 0
      %v516 = vsel %vm344, %v511, 0
      %518 = vmatprep.subr.mxu0 0.0
      %519 = vmatpush1.msra.mxu0 %v287
      %520 = vmatprep.subr.mxu0 0.0
      %521 = vmatpush1.msra.mxu0 %v353
      %522 = vmatprep.subr.mxu0 0.0
      %523 = vmatpush1.msra.mxu0 0.0
      %524 = vmatprep.subr.mxu0 0.0
      %525 = vmatpush1.msra.mxu0 0.0
      %526 = vmatprep.subr.mxu0 0.0
      %527 = vmatpush1.msra.mxu0 0.0
      %528 = vmatprep.subr.mxu0 0.0
      %529 = vmatpush1.msra.mxu0 0.0
      %530 = vmatprep.subr.mxu0 0.0
      %531 = vmatpush1.msra.mxu0 0.0
      %532 = vmatprep.subr.mxu0 0.0
      %533 = vmatpush1.msra.mxu0 0.0
      %534 = vmatprep.subr.mxu0 0.0
      %535 = vmatpush1.msra.mxu0 0.0
      %536 = vmatprep.subr.mxu0 0.0
      %537 = vmatpush1.msra.mxu0 0.0
      %538 = vmatprep.subr.mxu0 0.0
      %539 = vmatpush1.msra.mxu0 0.0
      %540 = vmatprep.subr.mxu0 0.0
      %541 = vmatpush1.msra.mxu0 0.0
      %542 = vmatprep.subr.mxu0 0.0
      %543 = vmatpush1.msra.mxu0 0.0
      %544 = vmatprep.subr.mxu0 0.0
      %545 = vmatpush1.msra.mxu0 0.0
      %546 = vmatprep.subr.mxu0 0.0
      %547 = vmatpush1.msra.mxu0 0.0
      %548 = vmatprep.subr.mxu0 0.0
      %549 = vmatpush1.msra.mxu0 0.0
      %550 = vmatprep.subr.mxu0 0.0
      %551 = vmatpush1.msra.mxu0 0.0
      %552 = vmatprep.subr.mxu0 0.0
      %553 = vmatpush1.msra.mxu0 0.0
      %554 = vmatprep.subr.mxu0 0.0
      %555 = vmatpush1.msra.mxu0 0.0
      %556 = vmatprep.subr.mxu0 0.0
      %557 = vmatpush1.msra.mxu0 0.0
      %558 = vmatprep.subr.mxu0 0.0
      %559 = vmatpush1.msra.mxu0 0.0
      %560 = vmatprep.subr.mxu0 0.0
      %561 = vmatpush1.msra.mxu0 0.0
      %562 = vmatprep.subr.mxu0 0.0
      %563 = vmatpush1.msra.mxu0 0.0
      %564 = vmatprep.subr.mxu0 0.0
      %565 = vmatpush1.msra.mxu0 0.0
      %566 = vmatprep.subr.mxu0 0.0
      %567 = vmatpush1.msra.mxu0 0.0
      %568 = vmatprep.subr.mxu0 0.0
      %569 = vmatpush1.msra.mxu0 0.0
      %570 = vmatprep.subr.mxu0 0.0
      %571 = vmatpush1.msra.mxu0 0.0
      %572 = vmatprep.subr.mxu0 0.0
      %573 = vmatpush1.msra.mxu0 0.0
      %574 = vmatprep.subr.mxu0 0.0
      %575 = vmatpush1.msra.mxu0 0.0
      %576 = vmatprep.subr.mxu0 0.0
      %577 = vmatpush1.msra.mxu0 0.0
      %578 = vmatprep.subr.mxu0 0.0
      %579 = vmatpush1.msra.mxu0 0.0
      %580 = vmatprep.subr.mxu0 0.0
      %581 = vmatpush1.msra.mxu0 0.0
      %582 = vmatprep.mubr.f32.mxu0 0.0
      %583 = vmatmul.mubr.f32.gmra.mrb[0].mxu0 %v513
      %v584 = vpop.f32.mrb[0].mxu0
      %v585 = vadd.f32 %v342, %v584
      %v586 = vpop.f32.mrb[0].mxu0
      %587 = vmatprep.mubr.f32.mxu0 0.0
      %588 = vmatmul.mubr.f32.gmra.mrb[0].mxu0 %v516
      %v589 = vpop.f32.mrb[0].mxu0
      %v590 = vadd.f32 %v342, %v589
      %v591 = vpop.f32.mrb[0].mxu0
      %592 = vdwg.mxu0
      %v593 = vsel %vm332, %v585, 0.0
      %v594 = vsel %vm431, %v590, 0.0
      %v595 = vadd.f32 %v593, %v594
      %596 = vadd.xlane.f32.xlu0 %v595
      %v597 = vpop.xlane.xlu0 %596
      %v598 = vrot.slane %v597, 4
      %v599 = vadd.f32 %v597, %v598
      %v600 = vrot.slane %v599, 2
      %v601 = vadd.f32 %v599, %v600
      %v602 = vrot.slane %v601, 1
      %v603 = vadd.f32 %v601, %v602
      %s604 = vtos %v603
      %s605 = smul.f32 %s604, 0.016666668
      %v606 = vmul.f32 %v585, %v585
      %v607 = vmul.f32 %v590, %v590
      %v608 = vsel %vm332, %v606, 0.0
      %v609 = vsel %vm431, %v607, 0.0
      %v610 = vadd.f32 %v608, %v609
      %611 = vadd.xlane.f32.xlu0 %v610
      %v612 = vpop.xlane.xlu0 %611
      %v613 = vrot.slane %v612, 4
      %v614 = vadd.f32 %v612, %v613
      %v615 = vrot.slane %v614, 2
      %v616 = vadd.f32 %v614, %v615
      %v617 = vrot.slane %v616, 1
      %v618 = vadd.f32 %v616, %v617
      %s619 = vtos %v618
      %s620 = smul.f32 %s619, 0.016666668
      %s621 = smul.f32 %s605, %s605
      %s622 = ssub.f32 %s620, %s621
      %v623 = vstv %s605
      %v624 = vsub.f32 %v585, %v623
      %v625 = vsub.f32 %v590, %v623
      %s626 = sadd.f32 %s622, 1e-05
      %v627 = vstv %s626
      %v628 = vrsqrt.pop %v627
      %s629 = vtos %v628
      %v630 = vstv %s629
      %v631 = vmul.f32 %v624, %v630
      %v632 = vmul.f32 %v625, %v630
      %v633 = vmul.f32 %v631, %v294
      %v634 = vmul.f32 %v632, %v295
      %v635 = vadd.f32 %v633, %v296
      %v636 = vadd.f32 %v634, %v297
      %v637 = vmax.f32 %v635, 0.0
      %v638 = vmax.f32 %v636, 0.0
      %v639 = vadd.f32 %v298, %v637
      %v640 = vadd.f32 %v299, %v638
      %641 = vst.msk [vmem:[%s285] sm:$0xff] %vm332, %v639
      %642 = vst.msk [vmem:[%s285 + $0x8] sm:$0x7f] %vm431, %v640
      %s643 = scalar_lea.vmem %s278, 16
      %v644 = vld [vmem:[%s643] sm:$0xff]
      %v645 = vld [vmem:[%s643 + $0x8] sm:$0x7f]
      %v648 = vrot.slane %v644, 6
      %v649 = vrot.slane %v645, 6
      %v650 = vsel %vm302, %v648, %v649
      %v653 = vsel %vm302, 0.0, %v648
      %v655 = vrot.slane %v653, 1
      %v656 = vrot.slane %v650, 1
      %v657 = vsel %vm310, %v655, %v656
      %658 = vrot.lane.b32.xlu0 %v657, 4
      %v659 = vpop.permute.xlu0 %658
      %660 = vrot.lane.b32.xlu0 %v656, 4
      %v661 = vpop.permute.xlu0 %660
      %v664 = vrot.slane %v653, 2
      %v665 = vrot.slane %v650, 2
      %v666 = vsel %vm320, %v664, %v665
      %v667 = vrot.slane %v649, 2
      %v668 = vsel %vm320, %v665, %v667
      %669 = vrot.lane.b32.xlu0 %v666, 8
      %v670 = vpop.permute.xlu0 %669
      %671 = vrot.lane.b32.xlu0 %v668, 8
      %v672 = vpop.permute.xlu0 %671
      %v675 = vsel %vm332, %v653, %v659
      %v676 = vsel %vm332, %v650, %v661
      %v677 = vsel %vm335, %v675, %v670
      %v678 = vsel %vm335, %v676, %v672
      %v680 = vsel %vm344, %v677, 0
      %v683 = vsel %vm344, %v678, 0
      %685 = vmatprep.subr.mxu0 0.0
      %686 = vmatpush1.msra.mxu0 %v287
      %687 = vmatprep.subr.mxu0 0.0
      %688 = vmatpush1.msra.mxu0 %v353
      %689 = vmatprep.subr.mxu0 0.0
      %690 = vmatpush1.msra.mxu0 0.0
      %691 = vmatprep.subr.mxu0 0.0
      %692 = vmatpush1.msra.mxu0 0.0
      %693 = vmatprep.subr.mxu0 0.0
      %694 = vmatpush1.msra.mxu0 0.0
      %695 = vmatprep.subr.mxu0 0.0
      %696 = vmatpush1.msra.mxu0 0.0
      %697 = vmatprep.subr.mxu0 0.0
      %698 = vmatpush1.msra.mxu0 0.0
      %699 = vmatprep.subr.mxu0 0.0
      %700 = vmatpush1.msra.mxu0 0.0
      %701 = vmatprep.subr.mxu0 0.0
      %702 = vmatpush1.msra.mxu0 0.0
      %703 = vmatprep.subr.mxu0 0.0
      %704 = vmatpush1.msra.mxu0 0.0
      %705 = vmatprep.subr.mxu0 0.0
      %706 = vmatpush1.msra.mxu0 0.0
      %707 = vmatprep.subr.mxu0 0.0
      %708 = vmatpush1.msra.mxu0 0.0
      %709 = vmatprep.subr.mxu0 0.0
      %710 = vmatpush1.msra.mxu0 0.0
      %711 = vmatprep.subr.mxu0 0.0
      %712 = vmatpush1.msra.mxu0 0.0
      %713 = vmatprep.subr.mxu0 0.0
      %714 = vmatpush1.msra.mxu0 0.0
      %715 = vmatprep.subr.mxu0 0.0
      %716 = vmatpush1.msra.mxu0 0.0
      %717 = vmatprep.subr.mxu0 0.0
      %718 = vmatpush1.msra.mxu0 0.0
      %719 = vmatprep.subr.mxu0 0.0
      %720 = vmatpush1.msra.mxu0 0.0
      %721 = vmatprep.subr.mxu0 0.0
      %722 = vmatpush1.msra.mxu0 0.0
      %723 = vmatprep.subr.mxu0 0.0
      %724 = vmatpush1.msra.mxu0 0.0
      %725 = vmatprep.subr.mxu0 0.0
      %726 = vmatpush1.msra.mxu0 0.0
      %727 = vmatprep.subr.mxu0 0.0
      %728 = vmatpush1.msra.mxu0 0.0
      %729 = vmatprep.subr.mxu0 0.0
      %730 = vmatpush1.msra.mxu0 0.0
      %731 = vmatprep.subr.mxu0 0.0
      %732 = vmatpush1.msra.mxu0 0.0
      %733 = vmatprep.subr.mxu0 0.0
      %734 = vmatpush1.msra.mxu0 0.0
      %735 = vmatprep.subr.mxu0 0.0
      %736 = vmatpush1.msra.mxu0 0.0
      %737 = vmatprep.subr.mxu0 0.0
      %738 = vmatpush1.msra.mxu0 0.0
      %739 = vmatprep.subr.mxu0 0.0
      %740 = vmatpush1.msra.mxu0 0.0
      %741 = vmatprep.subr.mxu0 0.0
      %742 = vmatpush1.msra.mxu0 0.0
      %743 = vmatprep.subr.mxu0 0.0
      %744 = vmatpush1.msra.mxu0 0.0
      %745 = vmatprep.subr.mxu0 0.0
      %746 = vmatpush1.msra.mxu0 0.0
      %747 = vmatprep.subr.mxu0 0.0
      %748 = vmatpush1.msra.mxu0 0.0
      %749 = vmatprep.mubr.f32.mxu0 0.0
      %750 = vmatmul.mubr.f32.gmra.mrb[0].mxu0 %v680
      %v751 = vpop.f32.mrb[0].mxu0
      %v752 = vadd.f32 %v342, %v751
      %v753 = vpop.f32.mrb[0].mxu0
      %754 = vmatprep.mubr.f32.mxu0 0.0
      %755 = vmatmul.mubr.f32.gmra.mrb[0].mxu0 %v683
      %v756 = vpop.f32.mrb[0].mxu0
      %v757 = vadd.f32 %v342, %v756
      %v758 = vpop.f32.mrb[0].mxu0
      %759 = vdwg.mxu0
      %v760 = vsel %vm332, %v752, 0.0
      %v761 = vsel %vm431, %v757, 0.0
      %v762 = vadd.f32 %v760, %v761
      %763 = vadd.xlane.f32.xlu0 %v762
      %v764 = vpop.xlane.xlu0 %763
      %v765 = vrot.slane %v764, 4
      %v766 = vadd.f32 %v764, %v765
      %v767 = vrot.slane %v766, 2
      %v768 = vadd.f32 %v766, %v767
      %v769 = vrot.slane %v768, 1
      %v770 = vadd.f32 %v768, %v769
      %s771 = vtos %v770
      %s772 = smul.f32 %s771, 0.016666668
      %v773 = vmul.f32 %v752, %v752
      %v774 = vmul.f32 %v757, %v757
      %v775 = vsel %vm332, %v773, 0.0
      %v776 = vsel %vm431, %v774, 0.0
      %v777 = vadd.f32 %v775, %v776
      %778 = vadd.xlane.f32.xlu0 %v777
      %v779 = vpop.xlane.xlu0 %778
      %v780 = vrot.slane %v779, 4
      %v781 = vadd.f32 %v779, %v780
      %v782 = vrot.slane %v781, 2
      %v783 = vadd.f32 %v781, %v782
      %v784 = vrot.slane %v783, 1
      %v785 = vadd.f32 %v783, %v784
      %s786 = vtos %v785
      %s787 = smul.f32 %s786, 0.016666668
      %s788 = smul.f32 %s772, %s772
      %s789 = ssub.f32 %s787, %s788
      %v790 = vstv %s772
      %v791 = vsub.f32 %v752, %v790
      %v792 = vsub.f32 %v757, %v790
      %s793 = sadd.f32 %s789, 1e-05
      %v794 = vstv %s793
      %v795 = vrsqrt.pop %v794
      %s796 = vtos %v795
      %v797 = vstv %s796
      %v798 = vmul.f32 %v791, %v797
      %v799 = vmul.f32 %v792, %v797
      %v800 = vmul.f32 %v798, %v290
      %v801 = vmul.f32 %v799, %v291
      %v802 = vadd.f32 %v800, %v292
      %v803 = vadd.f32 %v801, %v293
      %v804 = vmax.f32 %v802, 0.0
      %v805 = vmax.f32 %v803, 0.0
      %v808 = vrot.slane %v804, 4
      %v809 = vrot.slane %v805, 4
      %v810 = vsel %vm351, %v808, %v809
      %v813 = vsel %vm351, 0.0, %v808
      %v815 = vrot.slane %v813, 2
      %v816 = vrot.slane %v810, 2
      %v817 = vsel %vm320, %v815, %v816
      %v818 = vrot.slane %v809, 2
      %v819 = vsel %vm320, %v816, %v818
      %820 = vrot.lane.b32.xlu0 %v817, 4
      %v821 = vpop.permute.xlu0 %820
      %822 = vrot.lane.b32.xlu0 %v819, 4
      %v823 = vpop.permute.xlu0 %822
      %v826 = vrot.slane %v813, 4
      %v827 = vrot.slane %v810, 4
      %v828 = vsel %vm351, %v826, %v827
      %v829 = vrot.slane %v809, 4
      %v830 = vsel %vm351, %v827, %v829
      %831 = vrot.lane.b32.xlu0 %v828, 8
      %v832 = vpop.permute.xlu0 %831
      %833 = vrot.lane.b32.xlu0 %v830, 8
      %v834 = vpop.permute.xlu0 %833
      %v837 = vsel %vm332, %v813, %v821
      %v838 = vsel %vm332, %v810, %v823
      %v839 = vsel %vm335, %v837, %v832
      %v840 = vsel %vm335, %v838, %v834
      %v842 = vsel %vm344, %v839, 0
      %v845 = vsel %vm344, %v840, 0
      %847 = vmatprep.subr.mxu0 0.0
      %848 = vmatpush1.msra.mxu0 %v287
      %849 = vmatprep.subr.mxu0 0.0
      %850 = vmatpush1.msra.mxu0 %v353
      %851 = vmatprep.subr.mxu0 0.0
      %852 = vmatpush1.msra.mxu0 0.0
      %853 = vmatprep.subr.mxu0 0.0
      %854 = vmatpush1.msra.mxu0 0.0
      %855 = vmatprep.subr.mxu0 0.0
      %856 = vmatpush1.msra.mxu0 0.0
      %857 = vmatprep.subr.mxu0 0.0
      %858 = vmatpush1.msra.mxu0 0.0
      %859 = vmatprep.subr.mxu0 0.0
      %860 = vmatpush1.msra.mxu0 0.0
      %861 = vmatprep.subr.mxu0 0.0
      %862 = vmatpush1.msra.mxu0 0.0
      %863 = vmatprep.subr.mxu0 0.0
      %864 = vmatpush1.msra.mxu0 0.0
      %865 = vmatprep.subr.mxu0 0.0
      %866 = vmatpush1.msra.mxu0 0.0
      %867 = vmatprep.subr.mxu0 0.0
      %868 = vmatpush1.msra.mxu0 0.0
      %869 = vmatprep.subr.mxu0 0.0
      %870 = vmatpush1.msra.mxu0 0.0
      %871 = vmatprep.subr.mxu0 0.0
      %872 = vmatpush1.msra.mxu0 0.0
      %873 = vmatprep.subr.mxu0 0.0
      %874 = vmatpush1.msra.mxu0 0.0
      %875 = vmatprep.subr.mxu0 0.0
      %876 = vmatpush1.msra.mxu0 0.0
      %877 = vmatprep.subr.mxu0 0.0
      %878 = vmatpush1.msra.mxu0 0.0
      %879 = vmatprep.subr.mxu0 0.0
      %880 = vmatpush1.msra.mxu0 0.0
      %881 = vmatprep.subr.mxu0 0.0
      %882 = vmatpush1.msra.mxu0 0.0
      %883 = vmatprep.subr.mxu0 0.0
      %884 = vmatpush1.msra.mxu0 0.0
      %885 = vmatprep.subr.mxu0 0.0
      %886 = vmatpush1.msra.mxu0 0.0
      %887 = vmatprep.subr.mxu0 0.0
      %888 = vmatpush1.msra.mxu0 0.0
      %889 = vmatprep.subr.mxu0 0.0
      %890 = vmatpush1.msra.mxu0 0.0
      %891 = vmatprep.subr.mxu0 0.0
      %892 = vmatpush1.msra.mxu0 0.0
      %893 = vmatprep.subr.mxu0 0.0
      %894 = vmatpush1.msra.mxu0 0.0
      %895 = vmatprep.subr.mxu0 0.0
      %896 = vmatpush1.msra.mxu0 0.0
      %897 = vmatprep.subr.mxu0 0.0
      %898 = vmatpush1.msra.mxu0 0.0
      %899 = vmatprep.subr.mxu0 0.0
      %900 = vmatpush1.msra.mxu0 0.0
      %901 = vmatprep.subr.mxu0 0.0
      %902 = vmatpush1.msra.mxu0 0.0
      %903 = vmatprep.subr.mxu0 0.0
      %904 = vmatpush1.msra.mxu0 0.0
      %905 = vmatprep.subr.mxu0 0.0
      %906 = vmatpush1.msra.mxu0 0.0
      %907 = vmatprep.subr.mxu0 0.0
      %908 = vmatpush1.msra.mxu0 0.0
      %909 = vmatprep.subr.mxu0 0.0
      %910 = vmatpush1.msra.mxu0 0.0
      %911 = vmatprep.mubr.f32.mxu0 0.0
      %912 = vmatmul.mubr.f32.gmra.mrb[0].mxu0 %v842
      %v913 = vpop.f32.mrb[0].mxu0
      %v914 = vadd.f32 %v342, %v913
      %v915 = vpop.f32.mrb[0].mxu0
      %916 = vmatprep.mubr.f32.mxu0 0.0
      %917 = vmatmul.mubr.f32.gmra.mrb[0].mxu0 %v845
      %v918 = vpop.f32.mrb[0].mxu0
      %v919 = vadd.f32 %v342, %v918
      %v920 = vpop.f32.mrb[0].mxu0
      %921 = vdwg.mxu0
      %v922 = vsel %vm332, %v914, 0.0
      %v923 = vsel %vm431, %v919, 0.0
      %v924 = vadd.f32 %v922, %v923
      %925 = vadd.xlane.f32.xlu0 %v924
      %v926 = vpop.xlane.xlu0 %925
      %v927 = vrot.slane %v926, 4
      %v928 = vadd.f32 %v926, %v927
      %v929 = vrot.slane %v928, 2
      %v930 = vadd.f32 %v928, %v929
      %v931 = vrot.slane %v930, 1
      %v932 = vadd.f32 %v930, %v931
      %s933 = vtos %v932
      %s934 = smul.f32 %s933, 0.016666668
      %v935 = vmul.f32 %v914, %v914
      %v936 = vmul.f32 %v919, %v919
      %v937 = vsel %vm332, %v935, 0.0
      %v938 = vsel %vm431, %v936, 0.0
      %v939 = vadd.f32 %v937, %v938
      %940 = vadd.xlane.f32.xlu0 %v939
      %v941 = vpop.xlane.xlu0 %940
      %v942 = vrot.slane %v941, 4
      %v943 = vadd.f32 %v941, %v942
      %v944 = vrot.slane %v943, 2
      %v945 = vadd.f32 %v943, %v944
      %v946 = vrot.slane %v945, 1
      %v947 = vadd.f32 %v945, %v946
      %s948 = vtos %v947
      %s949 = smul.f32 %s948, 0.016666668
      %s950 = smul.f32 %s934, %s934
      %s951 = ssub.f32 %s949, %s950
      %v952 = vstv %s934
      %v953 = vsub.f32 %v914, %v952
      %v954 = vsub.f32 %v919, %v952
      %s955 = sadd.f32 %s951, 1e-05
      %v956 = vstv %s955
      %v957 = vrsqrt.pop %v956
      %s958 = vtos %v957
      %v959 = vstv %s958
      %v960 = vmul.f32 %v953, %v959
      %v961 = vmul.f32 %v954, %v959
      %v962 = vmul.f32 %v960, %v294
      %v963 = vmul.f32 %v961, %v295
      %v964 = vadd.f32 %v962, %v296
      %v965 = vadd.f32 %v963, %v297
      %v966 = vmax.f32 %v964, 0.0
      %v967 = vmax.f32 %v965, 0.0
      %v968 = vadd.f32 %v644, %v966
      %v969 = vadd.f32 %v645, %v967
      %s970 = scalar_lea.vmem %s285, 16
      %971 = vst.msk [vmem:[%s970] sm:$0xff] %vm332, %v968
      %972 = vst.msk [vmem:[%s970 + $0x8] sm:$0x7f] %vm431, %v969
      %s973 = smul.u32 2, %s18
      %p974 = scmp.lt.s32.totalorder %s973, 3
      %s975 = scalar_select %p974, %s973, 3
      %s976 = smul.addr %s975, 2
      %s977 = smul.addr %s976, 8
      %s978 = scalar_lea.vmem %s7, %s977
      // Predicated region
      $region49: #{tpu_custom_call.1} parent=47 // pred_check
        %p979 = pneg %p188
      $region50: #{tpu_custom_call.1} parent=47 // pred_check_branch
        %981 = sbr.rel (%p979) target = $region52
      $region51: #{tpu_custom_call.1} parent=47 // pred_region
        %s982 = smul.u32 2, %s18
      $region52: #{tpu_custom_call.1} parent=47 // pred_fallthru
        _
    $region48: #{tpu_custom_call.1} parent=5 // pred_fallthru
      _
    %p983 = scmp.le.s32.totalorder 2, %s13
    // Predicated region
    $region53: #{tpu_custom_call.1} parent=5 // pred_check
      %p984 = pneg %p983
    $region54: #{tpu_custom_call.1} parent=5 // pred_check_branch
      %986 = sbr.rel (%p984) target = $region56
    $region55: #{tpu_custom_call.1} parent=5 // pred_region
      %s987 = ssub.s32 %s13, 2
      // Predicated region
      $region57: #{tpu_custom_call.1} parent=55 // pred_check
        %p988 = pneg %p194
      $region58: #{tpu_custom_call.1} parent=55 // pred_check_branch
        %990 = sbr.rel (%p988) target = $region60
      $region59: #{tpu_custom_call.1} parent=55 // pred_region
        %s991 = smul.u32 2, %s19
        %p992 = scmp.lt.s32.totalorder %s991, 3
        %s993 = scalar_select %p992, %s991, 3
        %s994 = smul.addr %s993, 2
        %s995 = smul.addr %s994, 8
        %s996 = scalar_lea.vmem %s7, %s995
      $region60: #{tpu_custom_call.1} parent=55 // pred_fallthru
        _
    $region56: #{tpu_custom_call.1} parent=5 // pred_fallthru
      _
  $region6: #{tpu_custom_call.1} parent=0 // loop_footer
    %s17 = sadd.s32 1, %s13
  $region7: #{tpu_custom_call.1} parent=0 // loop_footer_branch
    %12 = sbr.rel target = $region3
  $region8: #{tpu_custom_call.1} parent=0 // loop_exit
    _

</llo_original>
